<compile_context>
chip_gen: v6e
topology: v6e:2x2x1
jax: 0.10.0
libtpu: 0.0.40
codegen_flags: <defaults>
</compile_context>

<pallas_src>
import jax
import jax.numpy as jnp
from jax.experimental import pallas as pl
from jax.experimental.pallas import tpu as pltpu

KH = KW = 3       # 3x3 "same" conv of the synthetic backbone
LANES = 128


def fused_conv_kernel(p_ref, w_ref, b_ref, o_ref):
    # p_ref: (block_m, GROUP*KH*KW*Cin)   lane-dense im2col rows (GROUP tokens/row)
    # w_ref: (GROUP*KH*KW*Cin, GROUP*Cout) block-diagonal weights (128 lanes)
    # b_ref: (1, GROUP*Cout)
    # o_ref: (block_m, GROUP*Cout)        lane-dense output slab
    acc = jnp.dot(p_ref[...], w_ref[...], preferred_element_type=jnp.float32)
    acc = acc + b_ref[...].astype(jnp.float32)
    o_ref[...] = jnp.maximum(acc, 0.0).astype(o_ref.dtype)   # backbone ReLU epilogue


def custom_cnn_forward(x_nchw, w_oihw, bias):
    """Equivalent of CustomCNNModel.forward({'pixel_values': x_nchw}).

    Returns (B, H*W, Cout)."""
    B, Cin, H, W = x_nchw.shape
    Cout = w_oihw.shape[0]
    assert LANES % Cout == 0, "toy backbone assumes Cout divides 128"
    group = LANES // Cout                 # tokens packed per lane-dense row
    tokens = B * H * W
    assert tokens % group == 0
    m_total = tokens // group             # rows of the lane-dense problem
    k = KH * KW * Cin                     # im2col contraction size per token

    # ---------------- wrapper glue: pure layout plumbing ----------------
    x_nhwc = jnp.transpose(x_nchw, (0, 2, 3, 1))
    x_pad = jnp.pad(x_nhwc, ((0, 0), (1, 1), (1, 1), (0, 0)))
    # im2col with feature order (kh, kw, cin) -- must match weight flattening.
    patches = jnp.concatenate(
        [x_pad[:, kh:kh + H, kw:kw + W, :]
         for kh in range(KH) for kw in range(KW)],
        axis=-1)                                     # (B, H, W, KH*KW*Cin)
    p_blk = patches.reshape(m_total, group * k)      # contiguous reshape

    w_flat = jnp.transpose(w_oihw, (2, 3, 1, 0)).reshape(k, Cout)     # (36, 32)
    w_blk = jnp.kron(jnp.eye(group, dtype=w_flat.dtype), w_flat)      # (144, 128)
    b_blk = jnp.tile(bias, group).reshape(1, group * Cout)            # (1, 128)

    # Two "parallel" grid steps so v7x can shard across its 2 TensorCores;
    # near-zero extra cost on v5e/v6e (single TC, ~0.35 us per step).
    num_blocks = 2 if (m_total % 16 == 0) else 1
    block_m = m_total // num_blocks

    out2d = pl.pallas_call(
        fused_conv_kernel,
        out_shape=jax.ShapeDtypeStruct((m_total, group * Cout), x_nchw.dtype),
        grid=(num_blocks,),
        in_specs=[
            pl.BlockSpec((block_m, group * k), lambda i: (i, 0)),
            pl.BlockSpec((group * k, group * Cout), lambda i: (0, 0)),
            pl.BlockSpec((1, group * Cout), lambda i: (0, 0)),
        ],
        out_specs=pl.BlockSpec((block_m, group * Cout), lambda i: (i, 0)),
        compiler_params=pltpu.CompilerParams(
            dimension_semantics=("parallel",)),
    )(p_blk, w_blk, b_blk)

    # Row-major (m_total, group*Cout) == row-major (B, H*W, Cout): free reshape.
    return out2d.reshape(B, H * W, Cout)


def reference_forward(x_nchw, w_oihw, bias):
    # Pure-JAX reference mirroring the PyTorch semantics exactly.
    conv = jax.lax.conv_general_dilated(
        x_nchw, w_oihw, window_strides=(1, 1), padding="SAME",
        dimension_numbers=("NCHW", "OIHW", "NCHW"))
    out = jnp.maximum(conv + bias[None, :, None, None], 0.0)   # model(x)[0]
    b, dim, h, w = out.shape
    return jnp.transpose(out.reshape(b, dim, h * w), (0, 2, 1))


if __name__ == "__main__":
    B, Cin, H, W = 2, 4, 16, 16
    Cout = 32

    key = jax.random.PRNGKey(0)
    kx, kw, kb = jax.random.split(key, 3)
    x = jax.random.normal(kx, (B, Cin, H, W), dtype=jnp.float32)
    w = jax.random.normal(kw, (Cout, Cin, KH, KW), dtype=jnp.float32) * 0.1
    bias = jax.random.normal(kb, (Cout,), dtype=jnp.float32) * 0.1

    out = custom_cnn_forward(x, w, bias)
    out = jax.block_until_ready(out)

    ref = reference_forward(x, w, bias)
    assert out.shape == (B, H * W, Cout), out.shape
    assert jnp.allclose(out, ref, atol=1e-4, rtol=1e-4), "mismatch vs reference"

    print("KERNEL_OK")
</pallas_src>

<mosaic_0001>
module attributes {stable_mosaic.version = 11 : i64} {
  func.func @fused_conv_kernel(%arg0: i32, %arg1: memref<64x144xf32, #tpu.memory_space<vmem>>, %arg2: memref<144x128xf32, #tpu.memory_space<vmem>>, %arg3: memref<1x128xf32, #tpu.memory_space<vmem>>, %arg4: memref<64x128xf32, #tpu.memory_space<vmem>>) attributes {dimension_semantics = [#tpu.dimension_semantics<parallel>], iteration_bounds = array<i64: 2>, scalar_prefetch = 0 : i64, scratch_operands = 0 : i64, tpu.core_type = #tpu.core_type<tc>, window_params = [{transform_indices = @transform_0, window_bounds = array<i64: 64, 144>}, {pipeline_mode = #tpu.pipeline_mode<synchronous>, transform_indices = @transform_1, window_bounds = array<i64: 144, 128>}, {pipeline_mode = #tpu.pipeline_mode<synchronous>, transform_indices = @transform_2, window_bounds = array<i64: 1, 128>}, {transform_indices = @transform_3, window_bounds = array<i64: 64, 128>}]} {
    %c0 = arith.constant 0 : index
    %c0_0 = arith.constant 0 : index
    %0 = vector.load %arg1[%c0, %c0_0] : memref<64x144xf32, #tpu.memory_space<vmem>>, vector<64x144xf32>
    %c0_1 = arith.constant 0 : index
    %c0_2 = arith.constant 0 : index
    %1 = vector.load %arg2[%c0_1, %c0_2] : memref<144x128xf32, #tpu.memory_space<vmem>>, vector<144x128xf32>
    %cst = arith.constant dense<0.000000e+00> : vector<64x128xf32>
    %2 = tpu.matmul %0, %1, %cst {dimension_numbers = #tpu.dot_dimension_numbers<[1], [0], [0], [1], [0, 0, 1, 1], [], []>} : vector<64x144xf32>, vector<144x128xf32>, vector<64x128xf32> -> vector<64x128xf32>
    %c0_3 = arith.constant 0 : index
    %c0_4 = arith.constant 0 : index
    %3 = vector.load %arg3[%c0_3, %c0_4] : memref<1x128xf32, #tpu.memory_space<vmem>>, vector<1x128xf32>
    %4 = vector.broadcast %3 : vector<1x128xf32> to vector<64x128xf32>
    %5 = arith.addf %2, %4 : vector<64x128xf32>
    %cst_5 = arith.constant 0.000000e+00 : f32
    %6 = vector.broadcast %cst_5 : f32 to vector<64x128xf32>
    %7 = arith.maximumf %5, %6 : vector<64x128xf32>
    %c0_6 = arith.constant 0 : index
    %c0_7 = arith.constant 0 : index
    %8 = vector.load %arg4[%c0_6, %c0_7] : memref<64x128xf32, #tpu.memory_space<vmem>>, vector<64x128xf32>
    tpu.vector_store %arg4[%c0_6, %c0_7], %7 {strides = array<i32>} : memref<64x128xf32, #tpu.memory_space<vmem>>, vector<64x128xf32>,
    return
  }
  func.func @transform_0(%arg0: i32) -> (i32, i32) {
    %c0_i32 = arith.constant 0 : i32
    %c0_i32_0 = arith.constant 0 : i32
    return %arg0, %c0_i32 : i32, i32
  }
  func.func @transform_1(%arg0: i32) -> (i32, i32) {
    %c0_i32 = arith.constant 0 : i32
    %c0_i32_0 = arith.constant 0 : i32
    %c0_i32_1 = arith.constant 0 : i32
    return %c0_i32, %c0_i32_0 : i32, i32
  }
  func.func @transform_2(%arg0: i32) -> (i32, i32) {
    %c0_i32 = arith.constant 0 : i32
    %c0_i32_0 = arith.constant 0 : i32
    %c0_i32_1 = arith.constant 0 : i32
    return %c0_i32, %c0_i32_0 : i32, i32
  }
  func.func @transform_3(%arg0: i32) -> (i32, i32) {
    %c0_i32 = arith.constant 0 : i32
    %c0_i32_0 = arith.constant 0 : i32
    return %arg0, %c0_i32 : i32, i32
  }
}

</mosaic_0001>

<llo_original>
// kernel: tpu_custom_call.1
$region0: #{tpu_custom_call.1}
  #allocation0 [shape = 'u32[]', space=smem, size = 0x4, offset = 0x4, fixed_abs, tag = 'smem constant byte address 0x4 - core index']
  #allocation1 [shape = 'u32[144,128]{1,0:T(1,128)}', space=vmem, size = 0x12000, scoped, tag = 'internal scratch']
  %s0 = inlined_call_operand.vmem [shape: f32[128,144], index: 0, kind: input, shape index: {}]
  %s1 = inlined_call_operand.vmem [shape: f32[144,128], index: 1, kind: input, shape index: {}]
  %s2 = inlined_call_operand.vmem [shape: f32[1,128], index: 2, kind: input, shape index: {}]
  %s3 = inlined_call_operand.hbm [shape: f32[128,128], index: 3, kind: output, shape index: {}]
  %s4 = sld [smem:[#allocation0]]
  $region45: #{tpu_custom_call.1} parent=0
    _
  %s6 = ssub.s32 1, %s4
  %s7 = scalar_select 0, %s6, %s4
  $region1: #{tpu_custom_call.1} parent=0
    #allocation2 [shape = 'u8[65536]{0}', space=vmem, size = 0x10000, scoped, tag = 'output window, operand 0']
    #allocation3 [shape = 's32[2]{0}', space=sflag, size = 0x8, scoped, tag = 'scoped memory for tpu_custom_call.1']
    %8 = vsyncpa [#allocation3], 0
    %s9 = scalar_lea.sflag [#allocation3], 1
    %10 = vsyncpa %s9, 0
    loop: start=0, step=1, limit=4
    $region2: #{tpu_custom_call.1} parent=1 // loop_pre_header
      _
    $region3: #{tpu_custom_call.1} parent=1 // loop_header
      %s12 = sphi 0, %s16
      %p13 = scmp.ge.s32.totalorder %s12, 4
      %s22 = sphi 0, %s24
      %s25 = sphi 0, %s22
      %s26 = sphi 0, %s25
      %s42 = sphi 0, %s26
      %s46 = sphi 0, %s46
      %s48 = sphi 0, %s46
      %s49 = sphi 0, %s48
      %s63 = sphi 0, %s49
      %s67 = sphi 0, %s67
      %s69 = sphi 0, %s67
      %s70 = sphi 0, %s69
      %s84 = sphi 0, %s70
      %s90 = sphi 0, %s92
      %s93 = sphi 0, %s90
      %s94 = sphi 0, %s93
      %s110 = sphi 0, %s94
    $region4: #{tpu_custom_call.1} parent=1 // loop_header_branch
      %15 = sbr.rel (%p13) target = $region8
    $region5: #{tpu_custom_call.1} parent=1 // loop_body
      %s17 = ssub.s32 %s12, 1
      %s18 = ssub.s32 %s12, 2
      %s19 = sadd.s32 %s12, 1
      %s20 = ssub.s32 %s12, %s19
      %p21 = scmp.eq.s32.totalorder %s20, 0
      %s23 = sadd.s32 %s22, 1
      %s24 = scalar_select %p21, %s22, %s23
      %p27 = pneg %p21
      %p28 = scmp.eq.s32.totalorder %s12, 1
      %p29 = por %p27, %p28
      %p30 = scmp.ne.s32.totalorder %s22, %s25
      %p31 = scmp.eq.s32.totalorder %s12, 0
      %p32 = por %p30, %p31
      %p33 = scmp.ne.s32.totalorder %s22, %s25
      %p34 = scmp.eq.s32.totalorder %s17, 1
      %p35 = por %p33, %p34
      %p36 = scmp.ne.s32.totalorder %s25, %s26
      %p37 = scmp.eq.s32.totalorder %s17, 0
      %p38 = por %p36, %p37
      %p39 = scmp.ne.s32.totalorder %s25, %s26
      %p40 = scmp.eq.s32.totalorder %s18, 1
      %p41 = por %p39, %p40
      %p43 = scmp.ne.s32.totalorder %s26, %s42
      %p44 = scmp.eq.s32.totalorder %s18, 0
      %p45 = por %p43, %p44
      %s47 = sadd.s32 %s46, 1
      %p50 = scmp.eq.s32.totalorder %s12, 1
      %p51 = scmp.ne.s32.totalorder %s46, %s48
      %p52 = scmp.eq.s32.totalorder %s12, 0
      %p53 = por %p51, %p52
      %p54 = scmp.ne.s32.totalorder %s46, %s48
      %p55 = scmp.eq.s32.totalorder %s17, 1
      %p56 = por %p54, %p55
      %p57 = scmp.ne.s32.totalorder %s48, %s49
      %p58 = scmp.eq.s32.totalorder %s17, 0
      %p59 = por %p57, %p58
      %p60 = scmp.ne.s32.totalorder %s48, %s49
      %p61 = scmp.eq.s32.totalorder %s18, 1
      %p62 = por %p60, %p61
      %p64 = scmp.ne.s32.totalorder %s49, %s63
      %p65 = scmp.eq.s32.totalorder %s18, 0
      %p66 = por %p64, %p65
      %s68 = sadd.s32 %s67, 1
      %p71 = scmp.eq.s32.totalorder %s12, 1
      %p72 = scmp.ne.s32.totalorder %s67, %s69
      %p73 = scmp.eq.s32.totalorder %s12, 0
      %p74 = por %p72, %p73
      %p75 = scmp.ne.s32.totalorder %s67, %s69
      %p76 = scmp.eq.s32.totalorder %s17, 1
      %p77 = por %p75, %p76
      %p78 = scmp.ne.s32.totalorder %s69, %s70
      %p79 = scmp.eq.s32.totalorder %s17, 0
      %p80 = por %p78, %p79
      %p81 = scmp.ne.s32.totalorder %s69, %s70
      %p82 = scmp.eq.s32.totalorder %s18, 1
      %p83 = por %p81, %p82
      %p85 = scmp.ne.s32.totalorder %s70, %s84
      %p86 = scmp.eq.s32.totalorder %s18, 0
      %p87 = por %p85, %p86
      %s88 = ssub.s32 %s12, %s19
      %p89 = scmp.eq.s32.totalorder %s88, 0
      %s91 = sadd.s32 %s90, 1
      %s92 = scalar_select %p89, %s90, %s91
      %p95 = pneg %p89
      %p96 = scmp.eq.s32.totalorder %s12, 1
      %p97 = por %p95, %p96
      %p98 = scmp.ne.s32.totalorder %s90, %s93
      %p99 = scmp.eq.s32.totalorder %s12, 0
      %p100 = por %p98, %p99
      %p101 = scmp.ne.s32.totalorder %s90, %s93
      %p102 = scmp.eq.s32.totalorder %s17, 1
      %p103 = por %p101, %p102
      %p104 = scmp.ne.s32.totalorder %s93, %s94
      %p105 = scmp.eq.s32.totalorder %s17, 0
      %p106 = por %p104, %p105
      %p107 = scmp.ne.s32.totalorder %s93, %s94
      %p108 = scmp.eq.s32.totalorder %s18, 1
      %p109 = por %p107, %p108
      %p111 = scmp.ne.s32.totalorder %s94, %s110
      %p112 = scmp.eq.s32.totalorder %s18, 0
      %p113 = por %p111, %p112
      %p114 = scmp.le.s32.totalorder 1, %s12
      %p115 = scmp.lt.s32.totalorder %s12, 3
      %p116 = pnand %p114, %p115
      %p117 = pneg %p116
      // Predicated region
      $region9: #{tpu_custom_call.1} parent=5 // pred_check
        _
      $region10: #{tpu_custom_call.1} parent=5 // pred_check_branch
        %119 = sbr.rel (%p116) target = $region12
      $region11: #{tpu_custom_call.1} parent=5 // pred_region
        %s120 = ssub.s32 %s12, 1
        // Predicated region
        $region13: #{tpu_custom_call.1} parent=11 // pred_check
          %p121 = pneg %p59
        $region14: #{tpu_custom_call.1} parent=11 // pred_check_branch
          %123 = sbr.rel (%p121) target = $region16
        $region15: #{tpu_custom_call.1} parent=11 // pred_region
          _
        $region16: #{tpu_custom_call.1} parent=11 // pred_fallthru
          _
        // Predicated region
        $region17: #{tpu_custom_call.1} parent=11 // pred_check
          %p124 = pneg %p80
        $region18: #{tpu_custom_call.1} parent=11 // pred_check_branch
          %126 = sbr.rel (%p124) target = $region20
        $region19: #{tpu_custom_call.1} parent=11 // pred_region
          _
        $region20: #{tpu_custom_call.1} parent=11 // pred_fallthru
          _
      $region12: #{tpu_custom_call.1} parent=5 // pred_fallthru
        _
      %p127 = scmp.lt.s32.totalorder %s12, 2
      // Predicated region
      $region21: #{tpu_custom_call.1} parent=5 // pred_check
        %p128 = pneg %p127
      $region22: #{tpu_custom_call.1} parent=5 // pred_check_branch
        %130 = sbr.rel (%p128) target = $region24
      $region23: #{tpu_custom_call.1} parent=5 // pred_region
        // Predicated region
        $region25: #{tpu_custom_call.1} parent=23 // pred_check
          %p131 = pneg %p32
        $region26: #{tpu_custom_call.1} parent=23 // pred_check_branch
          %133 = sbr.rel (%p131) target = $region28
        $region27: #{tpu_custom_call.1} parent=23 // pred_region
          %s134 = smul.u32 8, %s12
          %p135 = scmp.lt.s32.totalorder %s134, 15
          %s136 = scalar_select %p135, %s134, 15
          %s137 = smul.addr %s136, 2
          %s138 = smul.addr %s137, 8
          %s139 = scalar_lea.vmem %s0, %s138
          %s140 = smul.u32 8, %s12
        $region28: #{tpu_custom_call.1} parent=23 // pred_fallthru
          _
      $region24: #{tpu_custom_call.1} parent=5 // pred_fallthru
        _
      %p141 = scmp.le.s32.totalorder 1, %s12
      %p142 = scmp.lt.s32.totalorder %s12, 3
      %p143 = pnand %p141, %p142
      %p144 = pneg %p143
      // Predicated region
      $region29: #{tpu_custom_call.1} parent=5 // pred_check
        _
      $region30: #{tpu_custom_call.1} parent=5 // pred_check_branch
        %146 = sbr.rel (%p143) target = $region32
      $region31: #{tpu_custom_call.1} parent=5 // pred_region
        %s147 = ssub.s32 %s12, 1
        %s148 = smul.u32 8, %s17
        %p149 = scmp.lt.s32.totalorder %s148, 15
        %s150 = scalar_select %p149, %s148, 15
        %s151 = smul.addr %s150, 2
        %s152 = smul.addr %s151, 8
        %s153 = scalar_lea.vmem %s0, %s152
        %p154 = pneg %p38
        %p155 = pneg %p35
        %p156 = pneg %p59
        %p157 = pneg %p56
        %p158 = pneg %p80
        %p159 = pneg %p77
        %p160 = pneg %p106
        %p161 = pneg %p103
        %s162 = sand.u32 %s93, 1
        %s163 = scalar_lea.sflag [#allocation3], %s162
        %s164 = sand.u32 %s93, 1
        %s165 = smul.addr %s164, 64
        %s166 = scalar_lea.vmem [#allocation2], %s165
        %s167 = smul.u32 8, %s17
        %p168 = scmp.lt.s32.totalorder %s167, 15
        %s169 = scalar_select %p168, %s167, 15
        %s170 = smul.addr %s169, 2
        %s171 = smul.addr %s170, 8
        %s172 = scalar_lea.vmem %s0, %s171
        %s173 = smul.u32 8, %s17
        %s174 = smul.u32 8, %s17
        %v175 = vld [vmem:[%s172] sm:$0xff]
        %v176 = vld [vmem:[%s172 + $0x8] sm:$0xff]
        %v177 = vld [vmem:[%s172 + $0x10] sm:$0xff]
        %v178 = vld [vmem:[%s172 + $0x18] sm:$0xff]
        %v179 = vld [vmem:[%s172 + $0x20] sm:$0xff]
        %v180 = vld [vmem:[%s172 + $0x28] sm:$0xff]
        %v181 = vld [vmem:[%s172 + $0x30] sm:$0xff]
        %v182 = vld [vmem:[%s172 + $0x38] sm:$0xff]
        %v183 = vld [vmem:[%s172 + $0x40] sm:$0xff]
        %v184 = vld [vmem:[%s172 + $0x48] sm:$0xff]
        %v185 = vld [vmem:[%s172 + $0x50] sm:$0xff]
        %v186 = vld [vmem:[%s172 + $0x58] sm:$0xff]
        %v187 = vld [vmem:[%s172 + $0x60] sm:$0xff]
        %v188 = vld [vmem:[%s172 + $0x68] sm:$0xff]
        %v189 = vld [vmem:[%s172 + $0x70] sm:$0xff]
        %v190 = vld [vmem:[%s172 + $0x78] sm:$0xff]
        %v191 = vld [vmem:[%s1] sm:$0xff]
        %v192 = vld [vmem:[%s1 + $0x8] sm:$0xff]
        %v193 = vld [vmem:[%s1 + $0x10] sm:$0xff]
        %v194 = vld [vmem:[%s1 + $0x18] sm:$0xff]
        %v195 = vld [vmem:[%s1 + $0x20] sm:$0xff]
        %v196 = vld [vmem:[%s1 + $0x28] sm:$0xff]
        %v197 = vld [vmem:[%s1 + $0x30] sm:$0xff]
        %v198 = vld [vmem:[%s1 + $0x38] sm:$0xff]
        %v199 = vld [vmem:[%s1 + $0x40] sm:$0xff]
        %v200 = vld [vmem:[%s1 + $0x48] sm:$0xff]
        %v201 = vld [vmem:[%s1 + $0x50] sm:$0xff]
        %v202 = vld [vmem:[%s1 + $0x58] sm:$0xff]
        %v203 = vld [vmem:[%s1 + $0x60] sm:$0xff]
        %v204 = vld [vmem:[%s1 + $0x68] sm:$0xff]
        %v205 = vld [vmem:[%s1 + $0x70] sm:$0xff]
        %v206 = vld [vmem:[%s1 + $0x78] sm:$0xff]
        %v207 = vld [vmem:[%s1 + $0x80] sm:$0xff]
        %v208 = vld [vmem:[%s1 + $0x88] sm:$0xff]
        %v209 = vld [vmem:[%s2] sm:$0x1]
        %v211 = vlaneseq
        %v212 = vshrl.u32 %v211, 7
        %v213 = vsub.s32 0, %v212
        %v214 = vrot.slane %v209, %v213
        %vm216 = vcmask 130048
        %v218 = vsel %vm216, %v176, 0
        %v221 = vsel %vm216, %v178, 0
        %v224 = vsel %vm216, %v180, 0
        %v227 = vsel %vm216, %v182, 0
        %v230 = vsel %vm216, %v184, 0
        %v233 = vsel %vm216, %v186, 0
        %v236 = vsel %vm216, %v188, 0
        %v239 = vsel %vm216, %v190, 0
        %241 = vmatprep.subr.mxu0 0.0
        %242 = vmatpush1.msra.mxu0 %v206
        %243 = vmatprep.subr.mxu0 0.0
        %244 = vmatpush1.msra.mxu0 %v205
        %245 = vmatprep.subr.mxu0 0.0
        %246 = vmatpush1.msra.mxu0 %v204
        %247 = vmatprep.subr.mxu0 0.0
        %248 = vmatpush1.msra.mxu0 %v203
        %249 = vmatprep.subr.mxu0 0.0
        %250 = vmatpush1.msra.mxu0 %v202
        %251 = vmatprep.subr.mxu0 0.0
        %252 = vmatpush1.msra.mxu0 %v201
        %253 = vmatprep.subr.mxu0 0.0
        %254 = vmatpush1.msra.mxu0 %v200
        %255 = vmatprep.subr.mxu0 0.0
        %256 = vmatpush1.msra.mxu0 %v199
        %257 = vmatprep.subr.mxu0 0.0
        %258 = vmatpush1.msra.mxu0 %v198
        %259 = vmatprep.subr.mxu0 0.0
        %260 = vmatpush1.msra.mxu0 %v197
        %261 = vmatprep.subr.mxu0 0.0
        %262 = vmatpush1.msra.mxu0 %v196
        %263 = vmatprep.subr.mxu0 0.0
        %264 = vmatpush1.msra.mxu0 %v195
        %265 = vmatprep.subr.mxu0 0.0
        %266 = vmatpush1.msra.mxu0 %v194
        %267 = vmatprep.subr.mxu0 0.0
        %268 = vmatpush1.msra.mxu0 %v193
        %269 = vmatprep.subr.mxu0 0.0
        %270 = vmatpush1.msra.mxu0 %v192
        %271 = vmatprep.subr.mxu0 0.0
        %272 = vmatpush1.msra.mxu0 %v191
        %273 = vmatprep.subr.mxu0 0.0
        %274 = vmatpush2.msra.mxu0 0.0
        %275 = vmatprep.subr.mxu0 0.0
        %276 = vmatpush2.msra.mxu0 0.0
        %277 = vmatprep.subr.mxu0 0.0
        %278 = vmatpush2.msra.mxu0 0.0
        %279 = vmatprep.subr.mxu0 0.0
        %280 = vmatpush2.msra.mxu0 0.0
        %281 = vmatprep.subr.mxu0 0.0
        %282 = vmatpush2.msra.mxu0 0.0
        %283 = vmatprep.subr.mxu0 0.0
        %284 = vmatpush2.msra.mxu0 0.0
        %285 = vmatprep.subr.mxu0 0.0
        %286 = vmatpush2.msra.mxu0 0.0
        %287 = vmatprep.subr.mxu0 0.0
        %288 = vmatpush2.msra.mxu0 0.0
        %289 = vmatprep.subr.mxu0 0.0
        %290 = vmatpush2.msra.mxu0 0.0
        %291 = vmatprep.subr.mxu0 0.0
        %292 = vmatpush2.msra.mxu0 0.0
        %293 = vmatprep.subr.mxu0 0.0
        %294 = vmatpush2.msra.mxu0 0.0
        %295 = vmatprep.subr.mxu0 0.0
        %296 = vmatpush2.msra.mxu0 0.0
        %297 = vmatprep.subr.mxu0 0.0
        %298 = vmatpush2.msra.mxu0 0.0
        %299 = vmatprep.subr.mxu0 0.0
        %300 = vmatpush2.msra.mxu0 0.0
        %301 = vmatprep.subr.mxu0 0.0
        %302 = vmatpush2.msra.mxu0 %v208
        %303 = vmatprep.subr.mxu0 0.0
        %304 = vmatpush2.msra.mxu0 %v207
        %305 = vmatprep.mubr.f32.mxu0 %v218
        %306 = vmatmul.mubr.f32.gmra.mxu0 %v175
        %v307 = vpop.f32.mrf.mxu0
        %v308 = vadd.f32 %v214, %v307
        %v309 = vpop.f32.mrf.mxu0
        %310 = vmatprep.mubr.f32.mxu0 %v221
        %311 = vmatmul.mubr.f32.gmra.mxu0 %v177
        %v312 = vpop.f32.mrf.mxu0
        %v313 = vadd.f32 %v214, %v312
        %v314 = vpop.f32.mrf.mxu0
        %315 = vmatprep.mubr.f32.mxu0 %v224
        %316 = vmatmul.mubr.f32.gmra.mxu0 %v179
        %v317 = vpop.f32.mrf.mxu0
        %v318 = vadd.f32 %v214, %v317
        %v319 = vpop.f32.mrf.mxu0
        %320 = vmatprep.mubr.f32.mxu0 %v227
        %321 = vmatmul.mubr.f32.gmra.mxu0 %v181
        %v322 = vpop.f32.mrf.mxu0
        %v323 = vadd.f32 %v214, %v322
        %v324 = vpop.f32.mrf.mxu0
        %325 = vmatprep.mubr.f32.mxu0 %v230
        %326 = vmatmul.mubr.f32.gmra.mxu0 %v183
        %v327 = vpop.f32.mrf.mxu0
        %v328 = vadd.f32 %v214, %v327
        %v329 = vpop.f32.mrf.mxu0
        %330 = vmatprep.mubr.f32.mxu0 %v233
        %331 = vmatmul.mubr.f32.gmra.mxu0 %v185
        %v332 = vpop.f32.mrf.mxu0
        %v333 = vadd.f32 %v214, %v332
        %v334 = vpop.f32.mrf.mxu0
        %335 = vmatprep.mubr.f32.mxu0 %v236
        %336 = vmatmul.mubr.f32.gmra.mxu0 %v187
        %v337 = vpop.f32.mrf.mxu0
        %v338 = vadd.f32 %v214, %v337
        %v339 = vpop.f32.mrf.mxu0
        %340 = vmatprep.mubr.f32.mxu0 %v239
        %341 = vmatmul.mubr.f32.gmra.mxu0 %v189
        %v342 = vpop.f32.mrf.mxu0
        %v343 = vadd.f32 %v214, %v342
        %v344 = vpop.f32.mrf.mxu0
        %345 = vdwg.mxu0
        %v346 = vmax.f32 %v308, 0.0
        %v347 = vmax.f32 %v313, 0.0
        %v348 = vmax.f32 %v318, 0.0
        %v349 = vmax.f32 %v323, 0.0
        %v350 = vmax.f32 %v328, 0.0
        %v351 = vmax.f32 %v333, 0.0
        %v352 = vmax.f32 %v338, 0.0
        %v353 = vmax.f32 %v343, 0.0
        %354 = vst [vmem:[%s166] sm:$0xff] %v346
        %355 = vst [vmem:[%s166 + $0x8] sm:$0xff] %v347
        %356 = vst [vmem:[%s166 + $0x10] sm:$0xff] %v348
        %357 = vst [vmem:[%s166 + $0x18] sm:$0xff] %v349
        %358 = vst [vmem:[%s166 + $0x20] sm:$0xff] %v350
        %359 = vst [vmem:[%s166 + $0x28] sm:$0xff] %v351
        %360 = vst [vmem:[%s166 + $0x30] sm:$0xff] %v352
        %361 = vst [vmem:[%s166 + $0x38] sm:$0xff] %v353
        %s362 = sand.u32 %s93, 1
        %s363 = scalar_lea.sflag [#allocation3], %s362
        %s364 = sand.u32 %s93, 1
        %s365 = smul.addr %s364, 64
        %s366 = scalar_lea.vmem [#allocation2], %s365
        // Predicated region
        $region33: #{tpu_custom_call.1} parent=31 // pred_check
          %p367 = pneg %p103
        $region34: #{tpu_custom_call.1} parent=31 // pred_check_branch
          %369 = sbr.rel (%p367) target = $region36
        $region35: #{tpu_custom_call.1} parent=31 // pred_region
          %s370 = smul.u32 8, %s17
          %s372 = ssub.s32 1024, 1024
          %373 = vsyncadd %s363, %s372
          %s374 = smul.addr %s370, 128
          %s375 = scalar_lea.hbm %s3, %s374
          %s376 = sshll.u32 %s366, 4
          %s377 = int_to_ptr.vmem [resolvable:$true] %s376
          %382 = dma.vmem_to_hbm [thread:$0]  %s377, 1024, %s375, %s363, 128, 128, 8
        $region36: #{tpu_custom_call.1} parent=31 // pred_fallthru
          _
      $region32: #{tpu_custom_call.1} parent=5 // pred_fallthru
        _
      %p383 = scmp.le.s32.totalorder 2, %s12
      // Predicated region
      $region37: #{tpu_custom_call.1} parent=5 // pred_check
        %p384 = pneg %p383
      $region38: #{tpu_custom_call.1} parent=5 // pred_check_branch
        %386 = sbr.rel (%p384) target = $region40
      $region39: #{tpu_custom_call.1} parent=5 // pred_region
        %s387 = ssub.s32 %s12, 2
        // Predicated region
        $region41: #{tpu_custom_call.1} parent=39 // pred_check
          %p388 = pneg %p109
        $region42: #{tpu_custom_call.1} parent=39 // pred_check_branch
          %390 = sbr.rel (%p388) target = $region44
        $region43: #{tpu_custom_call.1} parent=39 // pred_region
          %s391 = sand.u32 %s94, 1
          %s392 = scalar_lea.sflag [#allocation3], %s391
          %s393 = sand.u32 %s94, 1
          %s394 = smul.addr %s393, 64
          %s395 = scalar_lea.vmem [#allocation2], %s394
          %396 = dma.done %s392, 1024
        $region44: #{tpu_custom_call.1} parent=39 // pred_fallthru
          _
      $region40: #{tpu_custom_call.1} parent=5 // pred_fallthru
        _
    $region6: #{tpu_custom_call.1} parent=1 // loop_footer
      %s16 = sadd.s32 1, %s12
    $region7: #{tpu_custom_call.1} parent=1 // loop_footer_branch
      %11 = sbr.rel target = $region3
    $region8: #{tpu_custom_call.1} parent=1 // loop_exit
      _
    %397 = vsyncpa [#allocation3], 1
    %s398 = scalar_lea.sflag [#allocation3], 1
    %399 = vsyncpa %s398, 1

</llo_original>
